<compile_context>
chip_gen: v6e
topology: v6e:2x2x1
jax: 0.10.0
libtpu: 0.0.40
codegen_flags: <defaults>
</compile_context>

<pallas_src>
import math

import jax
import jax.numpy as jnp
from jax.experimental import pallas as pl
from jax.experimental.pallas import tpu as pltpu

_LOG_CLAMP = math.log(1e-30)   # clamp_min(1e-30).log() of the torch module
_PAD_LABEL = -2                # sentinel for wrapper-added batch padding rows
_NEG_FILL = -1e30              # class/batch padding value (exp -> 0, no inf math)


def _cross_entropy_kernel(logits_ref, label_ref, out_ref, m_sc, d_sc, g_sc):
    j = pl.program_id(1)                                 # class-tile index

    @pl.when(j == 0)
    def _():
        m_sc[...] = jnp.full_like(m_sc, -jnp.inf)        # running max
        d_sc[...] = jnp.zeros_like(d_sc)                 # running sum exp
        g_sc[...] = jnp.zeros_like(g_sc)                 # gathered logit

    logits = logits_ref[...].astype(jnp.float32)         # (TB, TC)
    labels = label_ref[...]                              # (TB, 1) int32
    tb, tc = logits.shape

    # gather logits[b, label[b]] via a one-hot lane mask (offset by class-tile
    # start); padded / -1 / -2 labels never match, so they add 0.
    col = jax.lax.broadcasted_iota(jnp.int32, (tb, tc), 1) + j * tc
    onehot = col == labels
    g_sc[...] += jnp.sum(jnp.where(onehot, logits, 0.0), axis=1, keepdims=True)

    # online (streaming) log-sum-exp accumulation over class tiles
    m_prev = m_sc[...]
    m_new = jnp.maximum(m_prev, jnp.max(logits, axis=1, keepdims=True))
    d_sc[...] = (d_sc[...] * jnp.exp(m_prev - m_new)
                 + jnp.sum(jnp.exp(logits - m_new), axis=1, keepdims=True))
    m_sc[...] = m_new

    @pl.when(j == pl.num_programs(1) - 1)
    def _():
        lse = m_sc[...] + jnp.log(d_sc[...])             # (TB, 1)
        log_p = g_sc[...] - lse                          # (TB, 1)

        valid = labels >= 0             # real row with a real label
        padded = labels == _PAD_LABEL   # wrapper batch-padding rows -> 0
        # label == -1: torch leaves loss=0 -> clamp(1e-30).log() = log(1e-30)
        row_log = jnp.where(valid, jnp.maximum(log_p, _LOG_CLAMP), _LOG_CLAMP)
        row_log = jnp.where(padded, 0.0, row_log)

        partial = jnp.sum(row_log)                        # scalar per batch tile
        out_ref[...] = jnp.full(out_ref.shape, partial, dtype=jnp.float32)


def _round_up(x, m):
    return ((x + m - 1) // m) * m


def cross_entropy(logits, label):
    """logits: (B, C) float (f32/bf16; streamed at input width, cast to f32
    in-kernel); label: (B,) int with -1 = ignore. Returns scalar f32 matching
    the torch module's forward."""
    B, C = logits.shape
    itemsize = jnp.dtype(logits.dtype).itemsize

    # lane-dense class dim, tiled so very large vocabs still fit VMEM
    cp = _round_up(C, 128)
    tc = min(cp, 8 * 1024)
    cp = _round_up(cp, tc)

    # batch tile: 2 double-buffered input tiles + ~3 full-width f32 temporaries
    # per row, kept under ~12 MiB so it fits the scoped-VMEM region everywhere.
    per_row = tc * (2 * itemsize + 12) + 64
    tb = (12 * 1024 * 1024) // per_row
    tb = max(8, min(1024, (tb // 8) * 8))
    tb = min(tb, _round_up(B, 8))
    bp = _round_up(B, tb)

    if (cp != C) or (bp != B):
        logits = jnp.pad(logits, ((0, bp - B), (0, cp - C)),
                         constant_values=_NEG_FILL)
    label = label.astype(jnp.int32)
    if bp != B:
        label = jnp.pad(label, (0, bp - B), constant_values=_PAD_LABEL)
    label2d = label.reshape(bp, 1)

    nb = bp // tb
    nc = cp // tc

    partials = pl.pallas_call(
        _cross_entropy_kernel,
        out_shape=jax.ShapeDtypeStruct((nb, 8, 128), jnp.float32),
        grid_spec=pltpu.PrefetchScalarGridSpec(
            num_scalar_prefetch=0,
            grid=(nb, nc),
            in_specs=[
                pl.BlockSpec((tb, tc), lambda i, j: (i, j)),
                pl.BlockSpec((tb, 1), lambda i, j: (i, 0)),
            ],
            out_specs=pl.BlockSpec((1, 8, 128), lambda i, j: (i, 0, 0)),
            scratch_shapes=[
                pltpu.VMEM((tb, 1), jnp.float32),   # running max
                pltpu.VMEM((tb, 1), jnp.float32),   # running denom
                pltpu.VMEM((tb, 1), jnp.float32),   # gathered logit
            ],
        ),
        compiler_params=pltpu.CompilerParams(
            dimension_semantics=("parallel", "arbitrary"),
            vmem_limit_bytes=32 * 1024 * 1024,
        ),
    )(logits, label2d)

    total = jnp.sum(partials[:, 0, 0])   # tiny per-tile reduction in wrapper
    return -(total / B)


def _reference(logits, label):
    # pure-JAX mirror of the PyTorch module, for a sanity check
    logits = logits.astype(jnp.float32)
    m = jnp.max(logits, axis=1, keepdims=True)
    e = jnp.exp(logits - m)
    p = e / jnp.sum(e, axis=1, keepdims=True)
    B = logits.shape[0]
    gathered = p[jnp.arange(B), label]
    loss = jnp.where(label != -1, gathered, 0.0)
    loss = jnp.maximum(loss, 1e-30)
    return -jnp.mean(jnp.log(loss))


if __name__ == "__main__":
    key = jax.random.PRNGKey(0)
    B, C = 8, 32
    k1, k2 = jax.random.split(key)
    logits = jax.random.normal(k1, (B, C), dtype=jnp.float32)
    label = jax.random.randint(k2, (B,), 0, C, dtype=jnp.int32)
    # exercise the ignore-index (-1) path like the torch module supports
    label = label.at[3].set(-1)

    out = jax.block_until_ready(cross_entropy(logits, label))
    ref = _reference(logits, label)
    assert jnp.allclose(out, ref, rtol=1e-5, atol=1e-5), (out, ref)
    print("KERNEL_OK")
</pallas_src>

<mosaic_0001>
module attributes {stable_mosaic.version = 11 : i64} {
  func.func @_cross_entropy_kernel(%arg0: i32, %arg1: i32, %arg2: memref<8x128xf32, #tpu.memory_space<vmem>>, %arg3: memref<8x1xi32, #tpu.memory_space<vmem>>, %arg4: memref<1x8x128xf32, #tpu.memory_space<vmem>>, %arg5: memref<8x1xf32, #tpu.memory_space<vmem>>, %arg6: memref<8x1xf32, #tpu.memory_space<vmem>>, %arg7: memref<8x1xf32, #tpu.memory_space<vmem>>) attributes {dimension_semantics = [#tpu.dimension_semantics<parallel>, #tpu.dimension_semantics<arbitrary>], iteration_bounds = array<i64: 1, 1>, scalar_prefetch = 0 : i64, scratch_operands = 3 : i64, tpu.core_type = #tpu.core_type<tc>, window_params = [{transform_indices = @transform_0, window_bounds = array<i64: 8, 128>}, {transform_indices = @transform_1, window_bounds = array<i64: 8, 1>}, {transform_indices = @transform_2, window_bounds = array<i64: 1, 8, 128>}]} {
    %c0_i32 = arith.constant 0 : i32
    %0 = arith.cmpi eq, %arg1, %c0_i32 : i32
    %1 = arith.extui %0 : i1 to i32
    %c0_i32_0 = arith.constant 0 : i32
    %2 = arith.cmpi ne, %1, %c0_i32_0 : i32
    scf.if %2 {
      %cst_21 = arith.constant 0xFF800000 : f32
      %37 = vector.broadcast %cst_21 : f32 to vector<8x1xf32>
      %c0_22 = arith.constant 0 : index
      %c0_23 = arith.constant 0 : index
      %38 = vector.load %arg5[%c0_22, %c0_23] : memref<8x1xf32, #tpu.memory_space<vmem>>, vector<8x1xf32>
      tpu.vector_store %arg5[%c0_22, %c0_23], %37 {strides = array<i32>} : memref<8x1xf32, #tpu.memory_space<vmem>>, vector<8x1xf32>,
      %cst_24 = arith.constant 0.000000e+00 : f32
      %39 = vector.broadcast %cst_24 : f32 to vector<8x1xf32>
      %c0_25 = arith.constant 0 : index
      %c0_26 = arith.constant 0 : index
      %40 = vector.load %arg6[%c0_25, %c0_26] : memref<8x1xf32, #tpu.memory_space<vmem>>, vector<8x1xf32>
      tpu.vector_store %arg6[%c0_25, %c0_26], %39 {strides = array<i32>} : memref<8x1xf32, #tpu.memory_space<vmem>>, vector<8x1xf32>,
      %cst_27 = arith.constant 0.000000e+00 : f32
      %41 = vector.broadcast %cst_27 : f32 to vector<8x1xf32>
      %c0_28 = arith.constant 0 : index
      %c0_29 = arith.constant 0 : index
      %42 = vector.load %arg7[%c0_28, %c0_29] : memref<8x1xf32, #tpu.memory_space<vmem>>, vector<8x1xf32>
      tpu.vector_store %arg7[%c0_28, %c0_29], %41 {strides = array<i32>} : memref<8x1xf32, #tpu.memory_space<vmem>>, vector<8x1xf32>,
    } else {
    }
    %c0 = arith.constant 0 : index
    %c0_1 = arith.constant 0 : index
    %3 = vector.load %arg2[%c0, %c0_1] : memref<8x128xf32, #tpu.memory_space<vmem>>, vector<8x128xf32>
    %c0_2 = arith.constant 0 : index
    %c0_3 = arith.constant 0 : index
    %4 = vector.load %arg3[%c0_2, %c0_3] : memref<8x1xi32, #tpu.memory_space<vmem>>, vector<8x1xi32>
    %5 = tpu.iota {dimensions = array<i32: 1>} : vector<8x128xi32>
    %c128_i32 = arith.constant 128 : i32
    %6 = arith.muli %arg1, %c128_i32 : i32
    %7 = vector.broadcast %6 : i32 to vector<8x128xi32>
    %8 = arith.addi %5, %7 : vector<8x128xi32>
    %9 = vector.broadcast %4 : vector<8x1xi32> to vector<8x128xi32>
    %10 = arith.cmpi eq, %8, %9 : vector<8x128xi32>
    %c0_4 = arith.constant 0 : index
    %c0_5 = arith.constant 0 : index
    %11 = vector.load %arg7[%c0_4, %c0_5] : memref<8x1xf32, #tpu.memory_space<vmem>>, vector<8x1xf32>
    %cst = arith.constant 0.000000e+00 : f32
    %12 = vector.broadcast %cst : f32 to vector<8x128xf32>
    %13 = arith.select %10, %3, %12 : vector<8x128xi1>, vector<8x128xf32>
    %cst_6 = arith.constant dense<0.000000e+00> : vector<8xf32>
    %14 = vector.multi_reduction <add>, %13, %cst_6 [1] : vector<8x128xf32> to vector<8xf32>
    %15 = vector.shape_cast %14 : vector<8xf32> to vector<8x1xf32>
    %16 = arith.addf %11, %15 : vector<8x1xf32>
    %c0_7 = arith.constant 0 : index
    %c0_8 = arith.constant 0 : index
    %17 = vector.load %arg7[%c0_7, %c0_8] : memref<8x1xf32, #tpu.memory_space<vmem>>, vector<8x1xf32>
    tpu.vector_store %arg7[%c0_7, %c0_8], %16 {strides = array<i32>} : memref<8x1xf32, #tpu.memory_space<vmem>>, vector<8x1xf32>,
    %c0_9 = arith.constant 0 : index
    %c0_10 = arith.constant 0 : index
    %18 = vector.load %arg5[%c0_9, %c0_10] : memref<8x1xf32, #tpu.memory_space<vmem>>, vector<8x1xf32>
    %cst_11 = arith.constant dense<0xFF800000> : vector<8xf32>
    %19 = vector.multi_reduction <maximumf>, %3, %cst_11 [1] : vector<8x128xf32> to vector<8xf32>
    %20 = vector.shape_cast %19 : vector<8xf32> to vector<8x1xf32>
    %21 = arith.maximumf %18, %20 : vector<8x1xf32>
    %c0_12 = arith.constant 0 : index
    %c0_13 = arith.constant 0 : index
    %22 = vector.load %arg6[%c0_12, %c0_13] : memref<8x1xf32, #tpu.memory_space<vmem>>, vector<8x1xf32>
    %23 = arith.subf %18, %21 : vector<8x1xf32>
    %24 = math.exp %23 : vector<8x1xf32>
    %25 = arith.mulf %22, %24 : vector<8x1xf32>
    %26 = vector.broadcast %21 : vector<8x1xf32> to vector<8x128xf32>
    %27 = arith.subf %3, %26 : vector<8x128xf32>
    %28 = math.exp %27 : vector<8x128xf32>
    %cst_14 = arith.constant dense<0.000000e+00> : vector<8xf32>
    %29 = vector.multi_reduction <add>, %28, %cst_14 [1] : vector<8x128xf32> to vector<8xf32>
    %30 = vector.shape_cast %29 : vector<8xf32> to vector<8x1xf32>
    %31 = arith.addf %25, %30 : vector<8x1xf32>
    %c0_15 = arith.constant 0 : index
    %c0_16 = arith.constant 0 : index
    %32 = vector.load %arg6[%c0_15, %c0_16] : memref<8x1xf32, #tpu.memory_space<vmem>>, vector<8x1xf32>
    tpu.vector_store %arg6[%c0_15, %c0_16], %31 {strides = array<i32>} : memref<8x1xf32, #tpu.memory_space<vmem>>, vector<8x1xf32>,
    %c0_17 = arith.constant 0 : index
    %c0_18 = arith.constant 0 : index
    %33 = vector.load %arg5[%c0_17, %c0_18] : memref<8x1xf32, #tpu.memory_space<vmem>>, vector<8x1xf32>
    tpu.vector_store %arg5[%c0_17, %c0_18], %21 {strides = array<i32>} : memref<8x1xf32, #tpu.memory_space<vmem>>, vector<8x1xf32>,
    %c0_i32_19 = arith.constant 0 : i32
    %34 = arith.cmpi eq, %arg1, %c0_i32_19 : i32
    %35 = arith.extui %34 : i1 to i32
    %c0_i32_20 = arith.constant 0 : i32
    %36 = arith.cmpi ne, %35, %c0_i32_20 : i32
    scf.if %36 {
      %c0_21 = arith.constant 0 : index
      %c0_22 = arith.constant 0 : index
      %37 = vector.load %arg5[%c0_21, %c0_22] : memref<8x1xf32, #tpu.memory_space<vmem>>, vector<8x1xf32>
      %c0_23 = arith.constant 0 : index
      %c0_24 = arith.constant 0 : index
      %38 = vector.load %arg6[%c0_23, %c0_24] : memref<8x1xf32, #tpu.memory_space<vmem>>, vector<8x1xf32>
      %39 = math.log %38 : vector<8x1xf32>
      %40 = arith.addf %37, %39 : vector<8x1xf32>
      %c0_25 = arith.constant 0 : index
      %c0_26 = arith.constant 0 : index
      %41 = vector.load %arg7[%c0_25, %c0_26] : memref<8x1xf32, #tpu.memory_space<vmem>>, vector<8x1xf32>
      %42 = arith.subf %41, %40 : vector<8x1xf32>
      %c0_i32_27 = arith.constant 0 : i32
      %43 = vector.broadcast %c0_i32_27 : i32 to vector<8x1xi32>
      %44 = arith.cmpi sge, %4, %43 : vector<8x1xi32>
      %c-2_i32 = arith.constant -2 : i32
      %45 = vector.broadcast %c-2_i32 : i32 to vector<8x1xi32>
      %46 = arith.cmpi eq, %4, %45 : vector<8x1xi32>
      %cst_28 = arith.constant -69.0775528 : f32
      %47 = vector.broadcast %cst_28 : f32 to vector<8x1xf32>
      %48 = arith.maximumf %42, %47 : vector<8x1xf32>
      %cst_29 = arith.constant -69.0775528 : f32
      %49 = vector.broadcast %cst_29 : f32 to vector<8x1xf32>
      %50 = arith.select %44, %48, %49 : vector<8x1xi1>, vector<8x1xf32>
      %cst_30 = arith.constant 0.000000e+00 : f32
      %51 = vector.broadcast %cst_30 : f32 to vector<8x1xf32>
      %52 = arith.select %46, %51, %50 : vector<8x1xi1>, vector<8x1xf32>
      %53 = vector.shape_cast %52 : vector<8x1xf32> to vector<1x8x1xf32>
      %cst_31 = arith.constant dense<0.000000e+00> : vector<1xf32>
      %54 = vector.multi_reduction <add>, %53, %cst_31 [1, 2] : vector<1x8x1xf32> to vector<1xf32>
      %55 = vector.shape_cast %54 : vector<1xf32> to vector<1x1x1xf32>
      %56 = vector.extract %55[0, 0, 0] : f32 from vector<1x1x1xf32>
      %57 = vector.broadcast %56 : f32 to vector<1x8x128xf32>
      %c0_32 = arith.constant 0 : index
      %c0_33 = arith.constant 0 : index
      %c0_34 = arith.constant 0 : index
      %58 = vector.load %arg4[%c0_32, %c0_33, %c0_34] : memref<1x8x128xf32, #tpu.memory_space<vmem>>, vector<1x8x128xf32>
      tpu.vector_store %arg4[%c0_32, %c0_33, %c0_34], %57 {strides = array<i32>} : memref<1x8x128xf32, #tpu.memory_space<vmem>>, vector<1x8x128xf32>,
    } else {
    }
    return
  }
  func.func @transform_0(%arg0: i32, %arg1: i32) -> (i32, i32) {
    %c0_i32 = arith.constant 0 : i32
    return %arg0, %arg1 : i32, i32
  }
  func.func @transform_1(%arg0: i32, %arg1: i32) -> (i32, i32) {
    %c0_i32 = arith.constant 0 : i32
    %c0_i32_0 = arith.constant 0 : i32
    return %arg0, %c0_i32 : i32, i32
  }
  func.func @transform_2(%arg0: i32, %arg1: i32) -> (i32, i32, i32) {
    %c0_i32 = arith.constant 0 : i32
    %c0_i32_0 = arith.constant 0 : i32
    %c0_i32_1 = arith.constant 0 : i32
    return %arg0, %c0_i32, %c0_i32_0 : i32, i32, i32
  }
}

</mosaic_0001>

<llo_original>
// kernel: tpu_custom_call.1
$region0: #{tpu_custom_call.1}
  #allocation0 [shape = 'u32[]', space=smem, size = 0x4, offset = 0x4, fixed_abs, tag = 'smem constant byte address 0x4 - core index']
  #allocation1 [shape = 'u32[144,128]{1,0:T(1,128)}', space=vmem, size = 0x12000, scoped, tag = 'internal scratch']
  #allocation2 [shape = 'f32[8,1]{1,0:T(8,128)}', space=vmem, size = 0x1000, scoped, tag = 'scratch operand']
  #allocation3 [shape = 'f32[8,1]{1,0:T(8,128)}', space=vmem, size = 0x1000, scoped, tag = 'scratch operand']
  #allocation4 [shape = 'f32[8,1]{1,0:T(8,128)}', space=vmem, size = 0x1000, scoped, tag = 'scratch operand']
  %s0 = inlined_call_operand.vmem [shape: f32[8,128], index: 0, kind: input, shape index: {}]
  %s1 = inlined_call_operand.vmem [shape: s32[8,1], index: 1, kind: input, shape index: {}]
  %s2 = inlined_call_operand.hbm [shape: f32[1,8,128], index: 2, kind: output, shape index: {}]
  %s3 = sld [smem:[#allocation0]]
  $region26: #{tpu_custom_call.1} parent=0
    _
  %s5 = ssub.s32 1, %s3
  %s6 = scalar_select 0, %s5, %s3
  $region1: #{tpu_custom_call.1} parent=0
    #allocation5 [shape = 'u8[4096]{0}', space=vmem, size = 0x1000, scoped, tag = 'output window, operand 0, single buffered']
    #allocation6 [shape = 's32[1]{0}', space=sflag, size = 0x4, scoped, tag = 'scoped memory for tpu_custom_call.1']
    %7 = vsyncpa [#allocation6], 0
    // Predicated region
    $region2: #{tpu_custom_call.1} parent=1 // pred_check
      _
    $region3: #{tpu_custom_call.1} parent=1 // pred_check_branch
      %9 = sbr.rel (0) target = $region5
    $region4: #{tpu_custom_call.1} parent=1 // pred_region
      _
    $region5: #{tpu_custom_call.1} parent=1 // pred_fallthru
      _
    // Predicated region
    $region6: #{tpu_custom_call.1} parent=1 // pred_check
      _
    $region7: #{tpu_custom_call.1} parent=1 // pred_check_branch
      %11 = sbr.rel (0) target = $region9
    $region8: #{tpu_custom_call.1} parent=1 // pred_region
      _
    $region9: #{tpu_custom_call.1} parent=1 // pred_fallthru
      _
    %p12 = scmp.eq.s32.totalorder 0, 0
    // Predicated region
    $region10: #{tpu_custom_call.1} parent=1 // pred_check
      %p13 = pneg %p12
    $region11: #{tpu_custom_call.1} parent=1 // pred_check_branch
      %15 = sbr.rel (%p13) target = $region13
    $region12: #{tpu_custom_call.1} parent=1 // pred_region
      %vm16 = vcmask 7168
      %17 = vst.msk [vmem:[#allocation2] sm:$0xff] %vm16, -inf
      %18 = vst.msk [vmem:[#allocation3] sm:$0xff] %vm16, 0.0
      %19 = vst.msk [vmem:[#allocation4] sm:$0xff] %vm16, 0.0
    $region13: #{tpu_custom_call.1} parent=1 // pred_fallthru
      _
    %v20 = vld [vmem:[%s0] sm:$0xff]
    %v21 = vld [vmem:[%s1] sm:$0xff]
    %v22 = vlaneseq
    %v23 = vand.u32 %v22, 127
    %s24 = smul.u32 0, 128
    %v25 = vstv %s24
    %v26 = vadd.s32 %v23, %v25
    %27 = vset.pattern.permute.xlu0 0
    %28 = vperm.xlu0 %27, %v21
    %v29 = vpop.permute.xlu0 %28
    %vm30 = vcmp.eq.s32.totalorder %v26, %v29
    %v31 = vld [vmem:[#allocation4] sm:$0xff]
    %v32 = vsel %vm30, %v20, 0.0
    %33 = vadd.xlane.f32.xlu0 %v32
    %v34 = vpop.xlane.xlu0 %33
    %v35 = vadd.f32 %v31, %v34
    %vm36 = vcmask 7168
    %37 = vst.msk [vmem:[#allocation4] sm:$0xff] %vm36, %v35
    %v38 = vld [vmem:[#allocation2] sm:$0xff]
    %39 = vmax.xlane.f32.xlu0 %v20
    %v40 = vpop.xlane.xlu0 %39
    %v41 = vmax.f32 %v38, %v40
    %v42 = vld [vmem:[#allocation3] sm:$0xff]
    %v43 = vsub.f32 %v38, %v41
    %v44 = vmul.f32 %v43, 1.442695
    %v45 = vpow.pop %v44
    %v46 = vmul.f32 %v42, %v45
    %48 = vset.pattern.permute.xlu0 0
    %49 = vperm.xlu0 %48, %v41
    %v50 = vpop.permute.xlu0 %49
    %v52 = vsub.f32 %v20, %v50
    %v53 = vmul.f32 %v52, 1.442695
    %v54 = vpow.pop %v53
    %55 = vadd.xlane.f32.xlu0 %v54
    %v56 = vpop.xlane.xlu0 %55
    %v57 = vadd.f32 %v46, %v56
    %58 = vst.msk [vmem:[#allocation3] sm:$0xff] %vm36, %v57
    %59 = vst.msk [vmem:[#allocation2] sm:$0xff] %vm36, %v41
    // Predicated region
    $region14: #{tpu_custom_call.1} parent=1 // pred_check
      %p60 = pneg %p12
    $region15: #{tpu_custom_call.1} parent=1 // pred_check_branch
      %62 = sbr.rel (%p60) target = $region17
    $region16: #{tpu_custom_call.1} parent=1 // pred_region
      %v63 = vld [vmem:[#allocation2] sm:$0xff]
      %v64 = vld [vmem:[#allocation3] sm:$0xff]
      %v65 = vlog2.pop %v64
      %v66 = vmul.f32 %v65, 0.6931472
      %v67 = vadd.f32 %v63, %v66
      %v68 = vld [vmem:[#allocation4] sm:$0xff]
      %v69 = vsub.f32 %v68, %v67
      %vm70 = vcmp.ge.s32.totalorder %v21, 0
      %vm71 = vcmp.eq.s32.totalorder %v21, 4294967294
      %v72 = vmax.f32 %v69, -69.07755
      %v73 = vsel %vm70, %v72, -69.07755
      %v74 = vsel %vm71, 0.0, %v73
      %v75 = vsel %vm36, %v74, 0.0
      %76 = vadd.xlane.f32.xlu0 %v75
      %v77 = vpop.xlane.xlu0 %76
      %v78 = vrot.slane %v77, 4
      %v79 = vadd.f32 %v77, %v78
      %v80 = vrot.slane %v79, 2
      %v81 = vadd.f32 %v79, %v80
      %v82 = vrot.slane %v81, 1
      %v83 = vadd.f32 %v81, %v82
      %s84 = vtos %v83
      %v85 = vstv %s84
      %86 = vst [vmem:[#allocation5] sm:$0xff] %v85
    $region17: #{tpu_custom_call.1} parent=1 // pred_fallthru
      _
    // Predicated region
    $region18: #{tpu_custom_call.1} parent=1 // pred_check
      _
    $region19: #{tpu_custom_call.1} parent=1 // pred_check_branch
      %88 = sbr.rel (0) target = $region21
    $region20: #{tpu_custom_call.1} parent=1 // pred_region
      %s90 = ssub.s32 128, 128
      %91 = vsyncadd [#allocation6], %s90
      %s93 = sshll.u32 [#allocation5], 4
      %s94 = int_to_ptr.vmem [resolvable:$true] %s93
      %96 = dma.vmem_to_hbm [thread:$0]  %s94, 128, %s2, [#allocation6]
    $region21: #{tpu_custom_call.1} parent=1 // pred_fallthru
      _
    // Predicated region
    $region22: #{tpu_custom_call.1} parent=1 // pred_check
      _
    $region23: #{tpu_custom_call.1} parent=1 // pred_check_branch
      %98 = sbr.rel (0) target = $region25
    $region24: #{tpu_custom_call.1} parent=1 // pred_region
      %99 = dma.done [#allocation6], 128
    $region25: #{tpu_custom_call.1} parent=1 // pred_fallthru
      _
    %100 = vsyncpa [#allocation6], 1

</llo_original>
